<compile_context>
chip_gen: v6e
topology: v6e:2x2x1
jax: 0.10.0
libtpu: 0.0.40
codegen_flags: <defaults>
</compile_context>

<pallas_src>
import numpy as np

import jax
import jax.numpy as jnp
from jax import lax
from jax.experimental import pallas as pl
from jax.experimental.pallas import tpu as pltpu

# ---- model hyper-params (small, consistent with the module) ----
BATCH = 2
SEQ = 8
D_MODEL = 32
NUM_HEADS = 4
DIM_HEAD = D_MODEL // NUM_HEADS
SCALE = DIM_HEAD ** -0.5
LN_EPS = 1e-5          # nn.LayerNorm default eps (Normalization does not forward its own eps)
ROWS = BATCH * SEQ     # 16: batch folded into sublane rows
LANES = 128            # lane width of the packed constants buffer

# ---- packed constants buffer: row offsets (all row blocks sublane-aligned) ----
_R_WQKV = 0      # rows   0: 32   [Wq' | Wk' | Wv' | 0]      (32,128)
_R_WO   = 32     # rows  32: 64   [Wo  | 0]                  (32,128)
_R_COS  = 64     # rows  64: 96   rope cos table             (32,128)
_R_SINA = 96     # rows  96:128   rope sin_a (-sin on even)  (32,128)
_R_SINB = 128    # rows 128:160   rope sin_b (+sin on odd)   (32,128)
_R_SEL  = 160    # rows 160:224   head selector              (64,128)
_R_BM   = 224    # rows 224:240   same-batch 0/1 mask        (16,128)
_R_VEC  = 240    # row 240 bias row, 241 out-LN gamma, 242 out-LN beta
CONST_ROWS = 248


# ----------------------------------------------------------------------------
# Pallas kernel: whole AttentionLayer forward in one invocation (no grid)
# ----------------------------------------------------------------------------
def _attention_kernel(src_ref, x_ref, c_ref, o_ref):
    """src_ref: (ROWS, D)        source rows  (-> q)
       x_ref  : (ROWS, D)        x rows       (-> k, v)
       c_ref  : (CONST_ROWS,128) packed constants (see row offsets above)
       o_ref  : (ROWS, D)
    """
    D = D_MODEL
    HR = NUM_HEADS * ROWS    # 64

    # ---- input LayerNorm (raw stats; affine folded into projection weights) ----
    xs = jnp.concatenate([src_ref[...], x_ref[...]], axis=0)        # (2*ROWS, D)
    mu = jnp.mean(xs, axis=-1, keepdims=True)
    var = jnp.mean(jnp.square(xs - mu), axis=-1, keepdims=True)
    xn = (xs - mu) * lax.rsqrt(var + LN_EPS)

    # ---- merged q/k/v projection: full 128-wide RHS, one bias-row broadcast ----
    proj = jnp.dot(xn, c_ref[_R_WQKV:_R_WQKV + D, :],
                   preferred_element_type=jnp.float32)              # (32, 128)
    proj = proj + c_ref[_R_VEC:_R_VEC + 1, :]

    # ---- rotary embedding applied once to the whole projection ----
    # Tables are identity (cos=1, sin=0) outside the q (source rows, lanes 0:32)
    # and k (x rows, lanes 32:64) regions; pair structure never crosses a lane-
    # boundary, and the zeros also mask roll wrap-around at lanes 0 / 127.
    cosT = c_ref[_R_COS:_R_COS + 2 * ROWS, :]
    sinaT = c_ref[_R_SINA:_R_SINA + 2 * ROWS, :]
    sinbT = c_ref[_R_SINB:_R_SINB + 2 * ROWS, :]
    nxt = pltpu.roll(proj, shift=LANES - 1, axis=1)   # proj[:, j+1] at lane j
    prv = pltpu.roll(proj, shift=1, axis=1)           # proj[:, j-1] at lane j
    proj = proj * cosT + nxt * sinaT + prv * sinbT

    # ---- q / k / v (row slices are free; two small lane-offset extractions) ----
    q = proj[0:ROWS, 0:D]                    # (16, 32)  softmax scale folded in
    k = proj[ROWS:2 * ROWS, D:2 * D]         # (16, 32)
    v = proj[ROWS:2 * ROWS, 2 * D:3 * D]     # (16, 32)

    # ---- block-expanded masked-matmul attention (no per-head slicing) ----
    sel = c_ref[_R_SEL:_R_SEL + HR, 0:D]     # (64, 32): row h*16+m keeps head-h lanes
    bm = c_ref[_R_BM:_R_BM + ROWS, 0:HR]     # (16, 64): 1 iff query/key in same batch
    k_sel = jnp.concatenate([k] * NUM_HEADS, axis=0) * sel          # (64, 32)
    v_sel = jnp.concatenate([v] * NUM_HEADS, axis=0) * sel          # (64, 32)

    # scores: s[r, h*16+m] = <q_head_h(r), k_head_h(m)>  (already scaled)
    s = lax.dot_general(q, k_sel, (((1,), (1,)), ((), ())),
                        preferred_element_type=jnp.float32)         # (16, 64)
    # per-row shift (same constant within every softmax group of the row)
    s = s - jnp.max(s, axis=-1, keepdims=True)
    p = jnp.exp(s) * bm                                             # (16, 64)

    # attention output and per-head denominators: two plain MXU passes
    o_un = lax.dot_general(p, v_sel, (((1,), (0,)), ((), ())),
                           preferred_element_type=jnp.float32)      # (16, 32)
    den = lax.dot_general(p, sel, (((1,), (0,)), ((), ())),
                          preferred_element_type=jnp.float32)       # (16, 32)
    attn = o_un / den                      # exact divide (was approx reciprocal)

    # ---- output projection (no bias) + output LayerNorm ----
    out = jnp.dot(attn, c_ref[_R_WO:_R_WO + D, 0:D],
                  preferred_element_type=jnp.float32)               # (16, 32)
    mu2 = jnp.mean(out, axis=-1, keepdims=True)
    var2 = jnp.mean(jnp.square(out - mu2), axis=-1, keepdims=True)
    o_ref[...] = ((out - mu2) * lax.rsqrt(var2 + LN_EPS)
                  * c_ref[_R_VEC + 1:_R_VEC + 2, 0:D]
                  + c_ref[_R_VEC + 2:_R_VEC + 3, 0:D])


# ----------------------------------------------------------------------------
# Wrapper: single pallas_call, no grid; 3 input DMAs (x, source, constants)
# ----------------------------------------------------------------------------
@jax.jit
def attention_layer_forward(x, source, consts):
    src2d = source.reshape(ROWS, D_MODEL)
    x2d = x.reshape(ROWS, D_MODEL)
    out2d = pl.pallas_call(
        _attention_kernel,
        out_shape=jax.ShapeDtypeStruct((ROWS, D_MODEL), jnp.float32),
    )(src2d, x2d, consts)
    return out2d.reshape(BATCH, SEQ, D_MODEL)


# ----------------------------------------------------------------------------
# Host-side parameter folding / packing (one lane-dense constants buffer)
# ----------------------------------------------------------------------------
def _rope_blocks(theta=10000.0):
    half = DIM_HEAD // 2
    freqs = 1.0 / theta ** (np.arange(0, DIM_HEAD, 2)[:half].astype(np.float32) / DIM_HEAD)
    ang = np.outer(np.arange(SEQ, dtype=np.float32), freqs)        # (SEQ, dh/2)
    cos = np.repeat(np.cos(ang), 2, axis=-1)                        # (SEQ, dh) pair-duplicated
    sin = np.repeat(np.sin(ang), 2, axis=-1)
    cos = np.tile(cos, (1, NUM_HEADS))                              # (SEQ, D)
    sin = np.tile(sin, (1, NUM_HEADS))
    even = (np.arange(D_MODEL) % 2 == 0)[None, :]
    sin_a = np.where(even, -sin, 0.0)    # pairs with t[j+1] on even lanes
    sin_b = np.where(even, 0.0, sin)     # pairs with t[j-1] on odd lanes
    return cos.astype(np.float32), sin_a.astype(np.float32), sin_b.astype(np.float32)


def pack_params(p):
    """Fold LN affine + softmax scale into the q/k/v projections and pack every
    constant into one lane-dense (CONST_ROWS, 128) buffer."""
    (wq, bq, wk, bk, wv, bv, wo,
     gq, bq_ln, gk, bk_ln, gv, bv_ln, g_out, b_out) = [np.asarray(t, np.float32) for t in p]

    wq_f = SCALE * (gq[:, None] * wq)
    bq_f = SCALE * (bq_ln @ wq + bq)
    wk_f = gk[:, None] * wk
    bk_f = bk_ln @ wk + bk
    wv_f = gv[:, None] * wv
    bv_f = bv_ln @ wv + bv

    C = np.zeros((CONST_ROWS, LANES), np.float32)

    # merged projection weights [Wq' | Wk' | Wv' | 0] and Wo in its own row block
    C[_R_WQKV:_R_WQKV + D_MODEL, 0:32] = wq_f
    C[_R_WQKV:_R_WQKV + D_MODEL, 32:64] = wk_f
    C[_R_WQKV:_R_WQKV + D_MODEL, 64:96] = wv_f
    C[_R_WO:_R_WO + D_MODEL, 0:32] = wo

    # rope tables for the full (2*ROWS, 128) projection layout
    cos_blk, sina_blk, sinb_blk = _rope_blocks()
    cosT = np.ones((2 * ROWS, LANES), np.float32)
    sinaT = np.zeros((2 * ROWS, LANES), np.float32)
    sinbT = np.zeros((2 * ROWS, LANES), np.float32)
    for b in range(BATCH):
        r0 = b * SEQ
        cosT[r0:r0 + SEQ, 0:32] = cos_blk            # q columns on source rows
        sinaT[r0:r0 + SEQ, 0:32] = sina_blk
        sinbT[r0:r0 + SEQ, 0:32] = sinb_blk
        cosT[ROWS + r0:ROWS + r0 + SEQ, 32:64] = cos_blk   # k columns on x rows
        sinaT[ROWS + r0:ROWS + r0 + SEQ, 32:64] = sina_blk
        sinbT[ROWS + r0:ROWS + r0 + SEQ, 32:64] = sinb_blk
    # roll wrap-around must be masked by zeros in the sin tables
    assert np.all(sinbT[:, 0] == 0.0) and np.all(sinaT[:, LANES - 1] == 0.0)
    C[_R_COS:_R_COS + 2 * ROWS] = cosT
    C[_R_SINA:_R_SINA + 2 * ROWS] = sinaT
    C[_R_SINB:_R_SINB + 2 * ROWS] = sinbT

    # head selector: row h*ROWS+m keeps only head-h's lanes
    sel = np.zeros((NUM_HEADS * ROWS, LANES), np.float32)
    for h in range(NUM_HEADS):
        sel[h * ROWS:(h + 1) * ROWS, h * DIM_HEAD:(h + 1) * DIM_HEAD] = 1.0
    C[_R_SEL:_R_SEL + NUM_HEADS * ROWS] = sel

    # same-batch mask: bm[r, h*ROWS + m] = 1 iff row r and key-row m share a batch
    bm = np.zeros((ROWS, LANES), np.float32)
    for r in range(ROWS):
        for h in range(NUM_HEADS):
            for m in range(ROWS):
                if r // SEQ == m // SEQ:
                    bm[r, h * ROWS + m] = 1.0
    C[_R_BM:_R_BM + ROWS] = bm

    # bias row for the merged projection + output-LN affine vectors
    C[_R_VEC, 0:32] = bq_f
    C[_R_VEC, 32:64] = bk_f
    C[_R_VEC, 64:96] = bv_f
    C[_R_VEC + 1, 0:32] = g_out
    C[_R_VEC + 2, 0:32] = b_out
    return jnp.asarray(C)


# ----------------------------------------------------------------------------
# Pure-JAX reference (mirrors the PyTorch AttentionLayer math exactly)
# ----------------------------------------------------------------------------
def ref_attention_layer(x, source, p):
    (wq, bq, wk, bk, wv, bv, wo,
     gq, bq_ln, gk, bk_ln, gv, bv_ln, g_out, b_out) = p
    B, N, D = x.shape

    def ln(t, g, b):
        mu = t.mean(-1, keepdims=True)
        var = ((t - mu) ** 2).mean(-1, keepdims=True)
        return (t - mu) / jnp.sqrt(var + LN_EPS) * g + b

    q = ln(source, gq, bq_ln) @ wq + bq
    k = ln(x, gk, bk_ln) @ wk + bk
    v = ln(x, gv, bv_ln) @ wv + bv

    def split(t):  # b n (h d) -> b h n d
        return t.reshape(B, N, NUM_HEADS, DIM_HEAD).transpose(0, 2, 1, 3)

    q, k, v = split(q), split(k), split(v)

    half = DIM_HEAD // 2
    freqs = 1.0 / (10000.0 ** (jnp.arange(0, DIM_HEAD, 2)[:half].astype(jnp.float32) / DIM_HEAD))
    ang = jnp.outer(jnp.arange(N, dtype=jnp.float32), freqs)       # (N, dh/2)
    cos_, sin_ = jnp.cos(ang), jnp.sin(ang)

    def rope(t):  # complex-pair rotation, as in apply_rotary_emb
        tr = t.reshape(B, NUM_HEADS, N, half, 2)
        a, b = tr[..., 0], tr[..., 1]
        real = a * cos_ - b * sin_
        imag = a * sin_ + b * cos_
        return jnp.stack([real, imag], axis=-1).reshape(B, NUM_HEADS, N, DIM_HEAD)

    q, k = rope(q), rope(k)
    dots = jnp.einsum('bhnd,bhmd->bhnm', q, k) * SCALE
    attn = jax.nn.softmax(dots, axis=-1)
    out = jnp.einsum('bhnm,bhmd->bhnd', attn, v)
    out = out.transpose(0, 2, 1, 3).reshape(B, N, D)
    out = out @ wo                                    # to_out Linear (no bias); Dropout = identity
    return ln(out, g_out, b_out)


# ----------------------------------------------------------------------------
if __name__ == "__main__":
    key = jax.random.PRNGKey(0)
    ks = jax.random.split(key, 20)

    def nrm(k, shape, s):
        return s * jax.random.normal(k, shape, jnp.float32)

    wq = nrm(ks[0], (D_MODEL, D_MODEL), 0.1)
    bq = nrm(ks[1], (D_MODEL,), 0.02)
    wk = nrm(ks[2], (D_MODEL, D_MODEL), 0.1)
    bk = nrm(ks[3], (D_MODEL,), 0.02)
    wv = nrm(ks[4], (D_MODEL, D_MODEL), 0.1)
    bv = nrm(ks[5], (D_MODEL,), 0.02)
    wo = nrm(ks[6], (D_MODEL, D_MODEL), 0.1)
    gq = 1.0 + nrm(ks[7], (D_MODEL,), 0.05)
    bq_ln = nrm(ks[8], (D_MODEL,), 0.05)
    gk = 1.0 + nrm(ks[9], (D_MODEL,), 0.05)
    bk_ln = nrm(ks[10], (D_MODEL,), 0.05)
    gv = 1.0 + nrm(ks[11], (D_MODEL,), 0.05)
    bv_ln = nrm(ks[12], (D_MODEL,), 0.05)
    g_out = 1.0 + nrm(ks[13], (D_MODEL,), 0.05)
    b_out = nrm(ks[14], (D_MODEL,), 0.05)

    params = (wq, bq, wk, bk, wv, bv, wo,
              gq, bq_ln, gk, bk_ln, gv, bv_ln, g_out, b_out)

    x = jax.random.normal(ks[15], (BATCH, SEQ, D_MODEL), jnp.float32)
    source = jax.random.normal(ks[16], (BATCH, SEQ, D_MODEL), jnp.float32)

    consts = pack_params(params)
    out = attention_layer_forward(x, source, consts)
    out = jax.block_until_ready(out)

    ref = ref_attention_layer(x, source, params)
    np.testing.assert_allclose(np.asarray(out), np.asarray(ref), rtol=2e-3, atol=2e-3)

    print("KERNEL_OK")
</pallas_src>

<mosaic_0001>
module attributes {stable_mosaic.version = 11 : i64} {
  func.func @_attention_kernel(%arg0: memref<16x32xf32, #tpu.memory_space<vmem>>, %arg1: memref<16x32xf32, #tpu.memory_space<vmem>>, %arg2: memref<248x128xf32, #tpu.memory_space<vmem>>, %arg3: memref<16x32xf32, #tpu.memory_space<vmem>>) attributes {dimension_semantics = [], scalar_prefetch = 0 : i64, scratch_operands = 0 : i64, tpu.core_type = #tpu.core_type<tc>} {
    %c0 = arith.constant 0 : index
    %c0_0 = arith.constant 0 : index
    %0 = vector.load %arg0[%c0, %c0_0] : memref<16x32xf32, #tpu.memory_space<vmem>>, vector<16x32xf32>
    %c0_1 = arith.constant 0 : index
    %c0_2 = arith.constant 0 : index
    %1 = vector.load %arg1[%c0_1, %c0_2] : memref<16x32xf32, #tpu.memory_space<vmem>>, vector<16x32xf32>
    %2 = tpu.concatenate %0, %1 in 0 : vector<16x32xf32>, vector<16x32xf32> -> vector<32x32xf32>
    %cst = arith.constant dense<0.000000e+00> : vector<32xf32>
    %3 = vector.multi_reduction <add>, %2, %cst [1] : vector<32x32xf32> to vector<32xf32>
    %4 = vector.shape_cast %3 : vector<32xf32> to vector<32x1xf32>
    %cst_3 = arith.constant 3.200000e+01 : f32
    %5 = vector.broadcast %cst_3 : f32 to vector<32x1xf32>
    %6 = arith.divf %4, %5 : vector<32x1xf32>
    %7 = vector.broadcast %6 : vector<32x1xf32> to vector<32x32xf32>
    %8 = arith.subf %2, %7 : vector<32x32xf32>
    %9 = arith.mulf %8, %8 : vector<32x32xf32>
    %cst_4 = arith.constant dense<0.000000e+00> : vector<32xf32>
    %10 = vector.multi_reduction <add>, %9, %cst_4 [1] : vector<32x32xf32> to vector<32xf32>
    %11 = vector.shape_cast %10 : vector<32xf32> to vector<32x1xf32>
    %cst_5 = arith.constant 3.200000e+01 : f32
    %12 = vector.broadcast %cst_5 : f32 to vector<32x1xf32>
    %13 = arith.divf %11, %12 : vector<32x1xf32>
    %14 = vector.broadcast %6 : vector<32x1xf32> to vector<32x32xf32>
    %15 = arith.subf %2, %14 : vector<32x32xf32>
    %cst_6 = arith.constant 9.99999974E-6 : f32
    %16 = vector.broadcast %cst_6 : f32 to vector<32x1xf32>
    %17 = arith.addf %13, %16 : vector<32x1xf32>
    %18 = math.rsqrt %17 : vector<32x1xf32>
    %19 = vector.broadcast %18 : vector<32x1xf32> to vector<32x32xf32>
    %20 = arith.mulf %15, %19 : vector<32x32xf32>
    %c0_7 = arith.constant 0 : index
    %c0_8 = arith.constant 0 : index
    %21 = vector.load %arg2[%c0_7, %c0_8] : memref<248x128xf32, #tpu.memory_space<vmem>>, vector<32x128xf32>
    %cst_9 = arith.constant dense<0.000000e+00> : vector<32x128xf32>
    %22 = tpu.matmul %20, %21, %cst_9 {dimension_numbers = #tpu.dot_dimension_numbers<[1], [0], [0], [1], [0, 0, 1, 1], [], []>} : vector<32x32xf32>, vector<32x128xf32>, vector<32x128xf32> -> vector<32x128xf32>
    %c240 = arith.constant 240 : index
    %c0_10 = arith.constant 0 : index
    %23 = vector.load %arg2[%c240, %c0_10] : memref<248x128xf32, #tpu.memory_space<vmem>>, vector<1x128xf32>
    %24 = vector.broadcast %23 : vector<1x128xf32> to vector<32x128xf32>
    %25 = arith.addf %22, %24 : vector<32x128xf32>
    %c64 = arith.constant 64 : index
    %c0_11 = arith.constant 0 : index
    %26 = vector.load %arg2[%c64, %c0_11] : memref<248x128xf32, #tpu.memory_space<vmem>>, vector<32x128xf32>
    %c96 = arith.constant 96 : index
    %c0_12 = arith.constant 0 : index
    %27 = vector.load %arg2[%c96, %c0_12] : memref<248x128xf32, #tpu.memory_space<vmem>>, vector<32x128xf32>
    %c128 = arith.constant 128 : index
    %c0_13 = arith.constant 0 : index
    %28 = vector.load %arg2[%c128, %c0_13] : memref<248x128xf32, #tpu.memory_space<vmem>>, vector<32x128xf32>
    %c127_i32 = arith.constant 127 : i32
    %29 = tpu.dynamic_rotate %25 by %c127_i32 dim 1 : vector<32x128xf32>, i32 -> vector<32x128xf32>
    %c1_i32 = arith.constant 1 : i32
    %30 = tpu.dynamic_rotate %25 by %c1_i32 dim 1 : vector<32x128xf32>, i32 -> vector<32x128xf32>
    %31 = arith.mulf %25, %26 : vector<32x128xf32>
    %32 = arith.mulf %29, %27 : vector<32x128xf32>
    %33 = arith.addf %31, %32 : vector<32x128xf32>
    %34 = arith.mulf %30, %28 : vector<32x128xf32>
    %35 = arith.addf %33, %34 : vector<32x128xf32>
    %36 = vector.extract_strided_slice %35 {offsets = [0, 0], sizes = [16, 32], strides = [1, 1]} : vector<32x128xf32> to vector<16x32xf32>
    %37 = vector.extract_strided_slice %35 {offsets = [16, 32], sizes = [16, 32], strides = [1, 1]} : vector<32x128xf32> to vector<16x32xf32>
    %38 = vector.extract_strided_slice %35 {offsets = [16, 64], sizes = [16, 32], strides = [1, 1]} : vector<32x128xf32> to vector<16x32xf32>
    %c160 = arith.constant 160 : index
    %c0_14 = arith.constant 0 : index
    %39 = vector.load %arg2[%c160, %c0_14] : memref<248x128xf32, #tpu.memory_space<vmem>>, vector<64x32xf32>
    %c224 = arith.constant 224 : index
    %c0_15 = arith.constant 0 : index
    %40 = vector.load %arg2[%c224, %c0_15] : memref<248x128xf32, #tpu.memory_space<vmem>>, vector<16x64xf32>
    %41 = tpu.concatenate %37, %37, %37, %37 in 0 : vector<16x32xf32>, vector<16x32xf32>, vector<16x32xf32>, vector<16x32xf32> -> vector<64x32xf32>
    %42 = arith.mulf %41, %39 : vector<64x32xf32>
    %43 = tpu.concatenate %38, %38, %38, %38 in 0 : vector<16x32xf32>, vector<16x32xf32>, vector<16x32xf32>, vector<16x32xf32> -> vector<64x32xf32>
    %44 = arith.mulf %43, %39 : vector<64x32xf32>
    %cst_16 = arith.constant dense<0.000000e+00> : vector<16x64xf32>
    %45 = tpu.matmul %36, %42, %cst_16 {dimension_numbers = #tpu.dot_dimension_numbers<[1], [1], [0], [0], [0, 0, 1, 0], [], []>} : vector<16x32xf32>, vector<64x32xf32>, vector<16x64xf32> -> vector<16x64xf32>
    %cst_17 = arith.constant dense<0xFF800000> : vector<16xf32>
    %46 = vector.multi_reduction <maximumf>, %45, %cst_17 [1] : vector<16x64xf32> to vector<16xf32>
    %47 = vector.shape_cast %46 : vector<16xf32> to vector<16x1xf32>
    %48 = vector.broadcast %47 : vector<16x1xf32> to vector<16x64xf32>
    %49 = arith.subf %45, %48 : vector<16x64xf32>
    %50 = math.exp %49 : vector<16x64xf32>
    %51 = arith.mulf %50, %40 : vector<16x64xf32>
    %cst_18 = arith.constant dense<0.000000e+00> : vector<16x32xf32>
    %52 = tpu.matmul %51, %44, %cst_18 {dimension_numbers = #tpu.dot_dimension_numbers<[1], [0], [0], [1], [0, 0, 1, 1], [], []>} : vector<16x64xf32>, vector<64x32xf32>, vector<16x32xf32> -> vector<16x32xf32>
    %cst_19 = arith.constant dense<0.000000e+00> : vector<16x32xf32>
    %53 = tpu.matmul %51, %39, %cst_19 {dimension_numbers = #tpu.dot_dimension_numbers<[1], [0], [0], [1], [0, 0, 1, 1], [], []>} : vector<16x64xf32>, vector<64x32xf32>, vector<16x32xf32> -> vector<16x32xf32>
    %54 = arith.divf %52, %53 : vector<16x32xf32>
    %c32 = arith.constant 32 : index
    %c0_20 = arith.constant 0 : index
    %55 = vector.load %arg2[%c32, %c0_20] : memref<248x128xf32, #tpu.memory_space<vmem>>, vector<32x32xf32>
    %cst_21 = arith.constant dense<0.000000e+00> : vector<16x32xf32>
    %56 = tpu.matmul %54, %55, %cst_21 {dimension_numbers = #tpu.dot_dimension_numbers<[1], [0], [0], [1], [0, 0, 1, 1], [], []>} : vector<16x32xf32>, vector<32x32xf32>, vector<16x32xf32> -> vector<16x32xf32>
    %cst_22 = arith.constant dense<0.000000e+00> : vector<16xf32>
    %57 = vector.multi_reduction <add>, %56, %cst_22 [1] : vector<16x32xf32> to vector<16xf32>
    %58 = vector.shape_cast %57 : vector<16xf32> to vector<16x1xf32>
    %cst_23 = arith.constant 3.200000e+01 : f32
    %59 = vector.broadcast %cst_23 : f32 to vector<16x1xf32>
    %60 = arith.divf %58, %59 : vector<16x1xf32>
    %61 = vector.broadcast %60 : vector<16x1xf32> to vector<16x32xf32>
    %62 = arith.subf %56, %61 : vector<16x32xf32>
    %63 = arith.mulf %62, %62 : vector<16x32xf32>
    %cst_24 = arith.constant dense<0.000000e+00> : vector<16xf32>
    %64 = vector.multi_reduction <add>, %63, %cst_24 [1] : vector<16x32xf32> to vector<16xf32>
    %65 = vector.shape_cast %64 : vector<16xf32> to vector<16x1xf32>
    %cst_25 = arith.constant 3.200000e+01 : f32
    %66 = vector.broadcast %cst_25 : f32 to vector<16x1xf32>
    %67 = arith.divf %65, %66 : vector<16x1xf32>
    %68 = vector.broadcast %60 : vector<16x1xf32> to vector<16x32xf32>
    %69 = arith.subf %56, %68 : vector<16x32xf32>
    %cst_26 = arith.constant 9.99999974E-6 : f32
    %70 = vector.broadcast %cst_26 : f32 to vector<16x1xf32>
    %71 = arith.addf %67, %70 : vector<16x1xf32>
    %72 = math.rsqrt %71 : vector<16x1xf32>
    %73 = vector.broadcast %72 : vector<16x1xf32> to vector<16x32xf32>
    %74 = arith.mulf %69, %73 : vector<16x32xf32>
    %c241 = arith.constant 241 : index
    %c0_27 = arith.constant 0 : index
    %75 = vector.load %arg2[%c241, %c0_27] : memref<248x128xf32, #tpu.memory_space<vmem>>, vector<1x32xf32>
    %76 = vector.broadcast %75 : vector<1x32xf32> to vector<16x32xf32>
    %77 = arith.mulf %74, %76 : vector<16x32xf32>
    %c242 = arith.constant 242 : index
    %c0_28 = arith.constant 0 : index
    %78 = vector.load %arg2[%c242, %c0_28] : memref<248x128xf32, #tpu.memory_space<vmem>>, vector<1x32xf32>
    %79 = vector.broadcast %78 : vector<1x32xf32> to vector<16x32xf32>
    %80 = arith.addf %77, %79 : vector<16x32xf32>
    %c0_29 = arith.constant 0 : index
    %c0_30 = arith.constant 0 : index
    %81 = vector.load %arg3[%c0_29, %c0_30] : memref<16x32xf32, #tpu.memory_space<vmem>>, vector<16x32xf32>
    tpu.vector_store %arg3[%c0_29, %c0_30], %80 {strides = array<i32>} : memref<16x32xf32, #tpu.memory_space<vmem>>, vector<16x32xf32>,
    return
  }
}

</mosaic_0001>

<llo_original>
// kernel: attention_layer_forward.1
$region0: #{attention_layer_forward.1}
  #allocation0 [shape = 'u32[]', space=smem, size = 0x4, offset = 0x4, fixed_abs, tag = 'smem constant byte address 0x4 - core index']
  #allocation1 [shape = 'u32[144,128]{1,0:T(1,128)}', space=vmem, size = 0x12000, scoped, tag = 'internal scratch']
  %s0 = inlined_call_operand.hbm [shape: f32[16,32], index: 0, kind: input, shape index: {}]
  %s1 = inlined_call_operand.hbm [shape: f32[16,32], index: 1, kind: input, shape index: {}]
  %s2 = inlined_call_operand.hbm [shape: f32[248,128], index: 2, kind: input, shape index: {}]
  %s3 = inlined_call_operand.hbm [shape: f32[16,32], index: 3, kind: output, shape index: {}]
  %s4 = sld [smem:[#allocation0]]
  $region34: #{attention_layer_forward.1} parent=0
    _
  %s6 = ssub.s32 1, %s4
  %s7 = scalar_select 0, %s6, %s4
  $region1: #{attention_layer_forward.1} parent=0
    #allocation2 [shape = 'u8[8192]{0}', space=vmem, size = 0x2000, scoped, tag = 'input window, operand 0, single buffered']
    #allocation3 [shape = 's32[1]{0}', space=sflag, size = 0x4, scoped, tag = 'scoped memory for attention_layer_forward.1']
    #allocation4 [shape = 's32[1]{0}', space=sflag, size = 0x4, scoped, tag = 'scoped memory for attention_layer_forward.1']
    #allocation5 [shape = 'u8[8192]{0}', space=vmem, size = 0x2000, scoped, tag = 'input window, operand 1, single buffered']
    #allocation6 [shape = 's32[1]{0}', space=sflag, size = 0x4, scoped, tag = 'scoped memory for attention_layer_forward.1']
    #allocation7 [shape = 'u8[126976]{0}', space=vmem, size = 0x1f000, scoped, tag = 'input window, operand 2, single buffered']
    #allocation8 [shape = 'u8[8192]{0}', space=vmem, size = 0x2000, scoped, tag = 'output window, operand 0, single buffered']
    %8 = vsyncpa [#allocation3], 0
    %9 = vsyncpa [#allocation6], 0
    %10 = vsyncpa [#allocation4], 0
    // Predicated region
    $region2: #{attention_layer_forward.1} parent=1 // pred_check
      _
    $region3: #{attention_layer_forward.1} parent=1 // pred_check_branch
      %12 = sbr.rel (0) target = $region5
    $region4: #{attention_layer_forward.1} parent=1 // pred_region
      %s14 = ssub.s32 256, 256
      %15 = vsyncadd [#allocation3], %s14
      %s16 = sshll.u32 [#allocation2], 4
      %s17 = int_to_ptr.vmem [resolvable:$true] %s16
      %22 = dma.hbm_to_vmem [thread:$0]  %s0, 256, %s17, [#allocation3], 128, 128, 8
    $region5: #{attention_layer_forward.1} parent=1 // pred_fallthru
      _
    // Predicated region
    $region6: #{attention_layer_forward.1} parent=1 // pred_check
      _
    $region7: #{attention_layer_forward.1} parent=1 // pred_check_branch
      %24 = sbr.rel (0) target = $region9
    $region8: #{attention_layer_forward.1} parent=1 // pred_region
      %s26 = ssub.s32 256, 256
      %27 = vsyncadd [#allocation6], %s26
      %s28 = sshll.u32 [#allocation5], 4
      %s29 = int_to_ptr.vmem [resolvable:$true] %s28
      %34 = dma.hbm_to_vmem [thread:$0]  %s1, 256, %s29, [#allocation6], 128, 128, 8
    $region9: #{attention_layer_forward.1} parent=1 // pred_fallthru
      _
    // Predicated region
    $region10: #{attention_layer_forward.1} parent=1 // pred_check
      _
    $region11: #{attention_layer_forward.1} parent=1 // pred_check_branch
      %36 = sbr.rel (0) target = $region13
    $region12: #{attention_layer_forward.1} parent=1 // pred_region
      %s38 = ssub.s32 3968, 3968
      %39 = vsyncadd [#allocation6], %s38
      %s40 = sshll.u32 [#allocation7], 4
      %s41 = int_to_ptr.vmem [resolvable:$true] %s40
      %46 = dma.hbm_to_vmem [thread:$0]  %s2, 3968, %s41, [#allocation6], 128, 128, 8
    $region13: #{attention_layer_forward.1} parent=1 // pred_fallthru
      _
    // Predicated region
    $region14: #{attention_layer_forward.1} parent=1 // pred_check
      _
    $region15: #{attention_layer_forward.1} parent=1 // pred_check_branch
      %48 = sbr.rel (0) target = $region17
    $region16: #{attention_layer_forward.1} parent=1 // pred_region
      %49 = dma.done [#allocation3], 256
    $region17: #{attention_layer_forward.1} parent=1 // pred_fallthru
      _
    // Predicated region
    $region18: #{attention_layer_forward.1} parent=1 // pred_check
      _
    $region19: #{attention_layer_forward.1} parent=1 // pred_check_branch
      %51 = sbr.rel (0) target = $region21
    $region20: #{attention_layer_forward.1} parent=1 // pred_region
      %52 = dma.done [#allocation6], 256
    $region21: #{attention_layer_forward.1} parent=1 // pred_fallthru
      _
    // Predicated region
    $region22: #{attention_layer_forward.1} parent=1 // pred_check
      _
    $region23: #{attention_layer_forward.1} parent=1 // pred_check_branch
      %54 = sbr.rel (0) target = $region25
    $region24: #{attention_layer_forward.1} parent=1 // pred_region
      %55 = dma.done [#allocation6], 3968
    $region25: #{attention_layer_forward.1} parent=1 // pred_fallthru
      _
    %v56 = vld [vmem:[#allocation2] sm:$0xff]
    %v57 = vld [vmem:[#allocation2 + $0x8] sm:$0xff]
    %v58 = vld [vmem:[#allocation5] sm:$0xff]
    %v59 = vld [vmem:[#allocation5 + $0x8] sm:$0xff]
    %vm60 = vcmask 261120
    %v61 = vsel %vm60, %v56, 0.0
    %62 = vadd.xlane.f32.xlu0 %v61
    %v63 = vpop.xlane.xlu0 %62
    %v64 = vsel %vm60, %v57, 0.0
    %65 = vadd.xlane.f32.xlu0 %v64
    %v66 = vpop.xlane.xlu0 %65
    %v67 = vsel %vm60, %v58, 0.0
    %68 = vadd.xlane.f32.xlu0 %v67
    %v69 = vpop.xlane.xlu0 %68
    %v70 = vsel %vm60, %v59, 0.0
    %71 = vadd.xlane.f32.xlu0 %v70
    %v72 = vpop.xlane.xlu0 %71
    %v73 = vrcp.pop 32.0
    %v74 = vmul.f32 %v63, %v73
    %v75 = vmul.f32 %v66, %v73
    %v76 = vmul.f32 %v69, %v73
    %v77 = vmul.f32 %v72, %v73
    %v78 = vsub.f32 %v56, %v74
    %v79 = vsub.f32 %v57, %v75
    %v80 = vsub.f32 %v58, %v76
    %v81 = vsub.f32 %v59, %v77
    %v82 = vmul.f32 %v78, %v78
    %v83 = vmul.f32 %v79, %v79
    %v84 = vmul.f32 %v80, %v80
    %v85 = vmul.f32 %v81, %v81
    %v86 = vsel %vm60, %v82, 0.0
    %87 = vadd.xlane.f32.xlu0 %v86
    %v88 = vpop.xlane.xlu0 %87
    %v89 = vsel %vm60, %v83, 0.0
    %90 = vadd.xlane.f32.xlu0 %v89
    %v91 = vpop.xlane.xlu0 %90
    %v92 = vsel %vm60, %v84, 0.0
    %93 = vadd.xlane.f32.xlu0 %v92
    %v94 = vpop.xlane.xlu0 %93
    %v95 = vsel %vm60, %v85, 0.0
    %96 = vadd.xlane.f32.xlu0 %v95
    %v97 = vpop.xlane.xlu0 %96
    %v98 = vmul.f32 %v88, %v73
    %v99 = vmul.f32 %v91, %v73
    %v100 = vmul.f32 %v94, %v73
    %v101 = vmul.f32 %v97, %v73
    %v102 = vadd.f32 %v98, 1e-05
    %v103 = vadd.f32 %v99, 1e-05
    %v104 = vadd.f32 %v100, 1e-05
    %v105 = vadd.f32 %v101, 1e-05
    %v106 = vrsqrt.pop %v102
    %v107 = vrsqrt.pop %v103
    %v108 = vrsqrt.pop %v104
    %v109 = vrsqrt.pop %v105
    %v110 = vmul.f32 %v78, %v106
    %v111 = vmul.f32 %v79, %v107
    %v112 = vmul.f32 %v80, %v108
    %v113 = vmul.f32 %v81, %v109
    %v114 = vld [vmem:[#allocation7] sm:$0xff]
    %v115 = vld [vmem:[#allocation7 + $0x8] sm:$0xff]
    %v116 = vld [vmem:[#allocation7 + $0x10] sm:$0xff]
    %v117 = vld [vmem:[#allocation7 + $0x18] sm:$0xff]
    %v118 = vld [vmem:[#allocation7 + $0xf0] sm:$0x1]
    %v119 = vlaneseq
    %v120 = vshrl.u32 %v119, 7
    %v121 = vsub.s32 0, %v120
    %v122 = vrot.slane %v118, %v121
    %v124 = vsel %vm60, %v110, 0
    %v127 = vsel %vm60, %v111, 0
    %v130 = vsel %vm60, %v112, 0
    %v133 = vsel %vm60, %v113, 0
    %135 = vmatprep.subr.mxu0 0.0
    %136 = vmatpush1.msra.mxu0 0.0
    %137 = vmatprep.subr.mxu0 0.0
    %138 = vmatpush1.msra.mxu0 0.0
    %139 = vmatprep.subr.mxu0 0.0
    %140 = vmatpush1.msra.mxu0 0.0
    %141 = vmatprep.subr.mxu0 0.0
    %142 = vmatpush1.msra.mxu0 0.0
    %143 = vmatprep.subr.mxu0 0.0
    %144 = vmatpush1.msra.mxu0 0.0
    %145 = vmatprep.subr.mxu0 0.0
    %146 = vmatpush1.msra.mxu0 0.0
    %147 = vmatprep.subr.mxu0 0.0
    %148 = vmatpush1.msra.mxu0 0.0
    %149 = vmatprep.subr.mxu0 0.0
    %150 = vmatpush1.msra.mxu0 0.0
    %151 = vmatprep.subr.mxu0 0.0
    %152 = vmatpush1.msra.mxu0 0.0
    %153 = vmatprep.subr.mxu0 0.0
    %154 = vmatpush1.msra.mxu0 0.0
    %155 = vmatprep.subr.mxu0 0.0
    %156 = vmatpush1.msra.mxu0 0.0
    %157 = vmatprep.subr.mxu0 0.0
    %158 = vmatpush1.msra.mxu0 0.0
    %159 = vmatprep.subr.mxu0 0.0
    %160 = vmatpush1.msra.mxu0 %v117
    %161 = vmatprep.subr.mxu0 0.0
    %162 = vmatpush1.msra.mxu0 %v116
    %163 = vmatprep.subr.mxu0 0.0
    %164 = vmatpush1.msra.mxu0 %v115
    %165 = vmatprep.subr.mxu0 0.0
    %166 = vmatpush1.msra.mxu0 %v114
    %167 = vmatprep.subr.mxu0 0.0
    %168 = vmatpush2.msra.mxu0 0.0
    %169 = vmatprep.subr.mxu0 0.0
    %170 = vmatpush2.msra.mxu0 0.0
    %171 = vmatprep.subr.mxu0 0.0
    %172 = vmatpush2.msra.mxu0 0.0
    %173 = vmatprep.subr.mxu0 0.0
    %174 = vmatpush2.msra.mxu0 0.0
    %175 = vmatprep.subr.mxu0 0.0
    %176 = vmatpush2.msra.mxu0 0.0
    %177 = vmatprep.subr.mxu0 0.0
    %178 = vmatpush2.msra.mxu0 0.0
    %179 = vmatprep.subr.mxu0 0.0
    %180 = vmatpush2.msra.mxu0 0.0
    %181 = vmatprep.subr.mxu0 0.0
    %182 = vmatpush2.msra.mxu0 0.0
    %183 = vmatprep.subr.mxu0 0.0
    %184 = vmatpush2.msra.mxu0 0.0
    %185 = vmatprep.subr.mxu0 0.0
    %186 = vmatpush2.msra.mxu0 0.0
    %187 = vmatprep.subr.mxu0 0.0
    %188 = vmatpush2.msra.mxu0 0.0
    %189 = vmatprep.subr.mxu0 0.0
    %190 = vmatpush2.msra.mxu0 0.0
    %191 = vmatprep.subr.mxu0 0.0
    %192 = vmatpush2.msra.mxu0 0.0
    %193 = vmatprep.subr.mxu0 0.0
    %194 = vmatpush2.msra.mxu0 0.0
    %195 = vmatprep.subr.mxu0 0.0
    %196 = vmatpush2.msra.mxu0 0.0
    %197 = vmatprep.subr.mxu0 0.0
    %198 = vmatpush2.msra.mxu0 0.0
    %199 = vmatprep.mubr.f32.mxu0 0.0
    %200 = vmatmul.mubr.f32.gmra.mxu0 %v124
    %v201 = vpop.f32.mrf.mxu0
    %v202 = vadd.f32 %v122, %v201
    %v203 = vpop.f32.mrf.mxu0
    %204 = vmatprep.mubr.f32.mxu0 0.0
    %205 = vmatmul.mubr.f32.gmra.mxu0 %v127
    %v206 = vpop.f32.mrf.mxu0
    %v207 = vadd.f32 %v122, %v206
    %v208 = vpop.f32.mrf.mxu0
    %209 = vmatprep.mubr.f32.mxu0 0.0
    %210 = vmatmul.mubr.f32.gmra.mxu0 %v130
    %v211 = vpop.f32.mrf.mxu0
    %v212 = vadd.f32 %v122, %v211
    %v213 = vpop.f32.mrf.mxu0
    %214 = vmatprep.mubr.f32.mxu0 0.0
    %215 = vmatmul.mubr.f32.gmra.mxu0 %v133
    %v216 = vpop.f32.mrf.mxu0
    %v217 = vadd.f32 %v122, %v216
    %v218 = vpop.f32.mrf.mxu0
    %219 = vdwg.mxu0
    %v220 = vld [vmem:[#allocation7 + $0x40] sm:$0xff]
    %v221 = vld [vmem:[#allocation7 + $0x48] sm:$0xff]
    %v222 = vld [vmem:[#allocation7 + $0x50] sm:$0xff]
    %v223 = vld [vmem:[#allocation7 + $0x58] sm:$0xff]
    %v224 = vld [vmem:[#allocation7 + $0x60] sm:$0xff]
    %v225 = vld [vmem:[#allocation7 + $0x68] sm:$0xff]
    %v226 = vld [vmem:[#allocation7 + $0x70] sm:$0xff]
    %v227 = vld [vmem:[#allocation7 + $0x78] sm:$0xff]
    %v228 = vld [vmem:[#allocation7 + $0x80] sm:$0xff]
    %v229 = vld [vmem:[#allocation7 + $0x88] sm:$0xff]
    %v230 = vld [vmem:[#allocation7 + $0x90] sm:$0xff]
    %v231 = vld [vmem:[#allocation7 + $0x98] sm:$0xff]
    %232 = vrot.lane.b32.xlu0 %v202, 127
    %v233 = vpop.permute.xlu0 %232
    %234 = vrot.lane.b32.xlu0 %v207, 127
    %v235 = vpop.permute.xlu0 %234
    %236 = vrot.lane.b32.xlu0 %v212, 127
    %v237 = vpop.permute.xlu0 %236
    %238 = vrot.lane.b32.xlu0 %v217, 127
    %v239 = vpop.permute.xlu0 %238
    %240 = vrot.lane.b32.xlu0 %v202, 1
    %v241 = vpop.permute.xlu0 %240
    %242 = vrot.lane.b32.xlu0 %v207, 1
    %v243 = vpop.permute.xlu0 %242
    %244 = vrot.lane.b32.xlu0 %v212, 1
    %v245 = vpop.permute.xlu0 %244
    %246 = vrot.lane.b32.xlu0 %v217, 1
    %v247 = vpop.permute.xlu0 %246
    %v248 = vmul.f32 %v202, %v220
    %v249 = vmul.f32 %v207, %v221
    %v250 = vmul.f32 %v212, %v222
    %v251 = vmul.f32 %v217, %v223
    %v252 = vmul.f32 %v233, %v224
    %v253 = vmul.f32 %v235, %v225
    %v254 = vmul.f32 %v237, %v226
    %v255 = vmul.f32 %v239, %v227
    %v256 = vadd.f32 %v248, %v252
    %v257 = vadd.f32 %v249, %v253
    %v258 = vadd.f32 %v250, %v254
    %v259 = vadd.f32 %v251, %v255
    %v260 = vmul.f32 %v241, %v228
    %v261 = vmul.f32 %v243, %v229
    %v262 = vmul.f32 %v245, %v230
    %v263 = vmul.f32 %v247, %v231
    %v264 = vadd.f32 %v256, %v260
    %v265 = vadd.f32 %v257, %v261
    %v266 = vadd.f32 %v258, %v262
    %v267 = vadd.f32 %v259, %v263
    %v268 = vld [vmem:[#allocation7 + $0xa0] sm:$0xff]
    %v269 = vld [vmem:[#allocation7 + $0xa8] sm:$0xff]
    %v270 = vld [vmem:[#allocation7 + $0xb0] sm:$0xff]
    %v271 = vld [vmem:[#allocation7 + $0xb8] sm:$0xff]
    %v272 = vld [vmem:[#allocation7 + $0xc0] sm:$0xff]
    %v273 = vld [vmem:[#allocation7 + $0xc8] sm:$0xff]
    %v274 = vld [vmem:[#allocation7 + $0xd0] sm:$0xff]
    %v275 = vld [vmem:[#allocation7 + $0xd8] sm:$0xff]
    %v276 = vld [vmem:[#allocation7 + $0xe0] sm:$0xff]
    %v277 = vld [vmem:[#allocation7 + $0xe8] sm:$0xff]
    %286 = vrot.lane.b32.xlu0 %v268, 32
    %v287 = vpop.permute.xlu0 %286
    %288 = vrot.lane.b32.xlu0 %v269, 32
    %v289 = vpop.permute.xlu0 %288
    %290 = vrot.lane.b32.xlu0 %v270, 32
    %v291 = vpop.permute.xlu0 %290
    %292 = vrot.lane.b32.xlu0 %v271, 32
    %v293 = vpop.permute.xlu0 %292
    %294 = vrot.lane.b32.xlu0 %v272, 32
    %v295 = vpop.permute.xlu0 %294
    %296 = vrot.lane.b32.xlu0 %v273, 32
    %v297 = vpop.permute.xlu0 %296
    %298 = vrot.lane.b32.xlu0 %v274, 32
    %v299 = vpop.permute.xlu0 %298
    %300 = vrot.lane.b32.xlu0 %v275, 32
    %v301 = vpop.permute.xlu0 %300
    %v310 = vmul.f32 %v266, %v287
    %v311 = vmul.f32 %v267, %v289
    %v312 = vmul.f32 %v266, %v291
    %v313 = vmul.f32 %v267, %v293
    %v314 = vmul.f32 %v266, %v295
    %v315 = vmul.f32 %v267, %v297
    %v316 = vmul.f32 %v266, %v299
    %v317 = vmul.f32 %v267, %v301
    %318 = vrot.lane.b32.xlu0 %v268, 64
    %v319 = vpop.permute.xlu0 %318
    %320 = vrot.lane.b32.xlu0 %v269, 64
    %v321 = vpop.permute.xlu0 %320
    %322 = vrot.lane.b32.xlu0 %v270, 64
    %v323 = vpop.permute.xlu0 %322
    %324 = vrot.lane.b32.xlu0 %v271, 64
    %v325 = vpop.permute.xlu0 %324
    %326 = vrot.lane.b32.xlu0 %v272, 64
    %v327 = vpop.permute.xlu0 %326
    %328 = vrot.lane.b32.xlu0 %v273, 64
    %v329 = vpop.permute.xlu0 %328
    %330 = vrot.lane.b32.xlu0 %v274, 64
    %v331 = vpop.permute.xlu0 %330
    %332 = vrot.lane.b32.xlu0 %v275, 64
    %v333 = vpop.permute.xlu0 %332
    %v342 = vmul.f32 %v266, %v319
    %v343 = vmul.f32 %v267, %v321
    %v344 = vmul.f32 %v266, %v323
    %v345 = vmul.f32 %v267, %v325
    %v346 = vmul.f32 %v266, %v327
    %v347 = vmul.f32 %v267, %v329
    %v348 = vmul.f32 %v266, %v331
    %v349 = vmul.f32 %v267, %v333
    %358 = vrot.lane.b32.xlu0 %v310, 96
    %v359 = vpop.permute.xlu0 %358
    %360 = vrot.lane.b32.xlu0 %v311, 96
    %v361 = vpop.permute.xlu0 %360
    %362 = vrot.lane.b32.xlu0 %v312, 96
    %v363 = vpop.permute.xlu0 %362
    %364 = vrot.lane.b32.xlu0 %v313, 96
    %v365 = vpop.permute.xlu0 %364
    %366 = vrot.lane.b32.xlu0 %v314, 96
    %v367 = vpop.permute.xlu0 %366
    %368 = vrot.lane.b32.xlu0 %v315, 96
    %v369 = vpop.permute.xlu0 %368
    %370 = vrot.lane.b32.xlu0 %v316, 96
    %v371 = vpop.permute.xlu0 %370
    %372 = vrot.lane.b32.xlu0 %v317, 96
    %v373 = vpop.permute.xlu0 %372
    %v375 = vsel %vm60, %v264, 0
    %v378 = vsel %vm60, %v265, 0
    %v380 = vsel %vm60, %v359, 0
    %v382 = vsel %vm60, %v361, 0
    %v384 = vsel %vm60, %v363, 0
    %v386 = vsel %vm60, %v365, 0
    %v388 = vsel %vm60, %v367, 0
    %v390 = vsel %vm60, %v369, 0
    %v392 = vsel %vm60, %v371, 0
    %v394 = vsel %vm60, %v373, 0
    %396 = vmatprep.subr.mxu0 0.0
    %397 = vmatpush1.xpose.msra.mxu0 0.0
    %398 = vmatprep.subr.mxu0 0.0
    %399 = vmatpush1.xpose.msra.mxu0 0.0
    %400 = vmatprep.subr.mxu0 0.0
    %401 = vmatpush1.xpose.msra.mxu0 0.0
    %402 = vmatprep.subr.mxu0 0.0
    %403 = vmatpush1.xpose.msra.mxu0 0.0
    %404 = vmatprep.subr.mxu0 0.0
    %405 = vmatpush1.xpose.msra.mxu0 0.0
    %406 = vmatprep.subr.mxu0 0.0
    %407 = vmatpush1.xpose.msra.mxu0 0.0
    %408 = vmatprep.subr.mxu0 0.0
    %409 = vmatpush1.xpose.msra.mxu0 0.0
    %410 = vmatprep.subr.mxu0 0.0
    %411 = vmatpush1.xpose.msra.mxu0 0.0
    %412 = vmatprep.subr.mxu0 0.0
    %413 = vmatpush1.xpose.msra.mxu0 %v394
    %414 = vmatprep.subr.mxu0 0.0
    %415 = vmatpush1.xpose.msra.mxu0 %v392
    %416 = vmatprep.subr.mxu0 0.0
    %417 = vmatpush1.xpose.msra.mxu0 %v390
    %418 = vmatprep.subr.mxu0 0.0
    %419 = vmatpush1.xpose.msra.mxu0 %v388
    %420 = vmatprep.subr.mxu0 0.0
    %421 = vmatpush1.xpose.msra.mxu0 %v386
    %422 = vmatprep.subr.mxu0 0.0
    %423 = vmatpush1.xpose.msra.mxu0 %v384
    %424 = vmatprep.subr.mxu0 0.0
    %425 = vmatpush1.xpose.msra.mxu0 %v382
    %426 = vmatprep.subr.mxu0 0.0
    %427 = vmatpush1.xpose.msra.mxu0 %v380
    %428 = vmatprep.subr.mxu0 0.0
    %429 = vmatpush2.xpose.msra.mxu0 0.0
    %430 = vmatprep.subr.mxu0 0.0
    %431 = vmatpush2.xpose.msra.mxu0 0.0
    %432 = vmatprep.subr.mxu0 0.0
    %433 = vmatpush2.xpose.msra.mxu0 0.0
    %434 = vmatprep.subr.mxu0 0.0
    %435 = vmatpush2.xpose.msra.mxu0 0.0
    %436 = vmatprep.subr.mxu0 0.0
    %437 = vmatpush2.xpose.msra.mxu0 0.0
    %438 = vmatprep.subr.mxu0 0.0
    %439 = vmatpush2.xpose.msra.mxu0 0.0
    %440 = vmatprep.subr.mxu0 0.0
    %441 = vmatpush2.xpose.msra.mxu0 0.0
    %442 = vmatprep.subr.mxu0 0.0
    %443 = vmatpush2.xpose.msra.mxu0 0.0
    %444 = vmatprep.subr.mxu0 0.0
    %445 = vmatpush2.xpose.msra.mxu0 0.0
    %446 = vmatprep.subr.mxu0 0.0
    %447 = vmatpush2.xpose.msra.mxu0 0.0
    %448 = vmatprep.subr.mxu0 0.0
    %449 = vmatpush2.xpose.msra.mxu0 0.0
    %450 = vmatprep.subr.mxu0 0.0
    %451 = vmatpush2.xpose.msra.mxu0 0.0
    %452 = vmatprep.subr.mxu0 0.0
    %453 = vmatpush2.xpose.msra.mxu0 0.0
    %454 = vmatprep.subr.mxu0 0.0
    %455 = vmatpush2.xpose.msra.mxu0 0.0
    %456 = vmatprep.subr.mxu0 0.0
    %457 = vmatpush2.xpose.msra.mxu0 0.0
    %458 = vmatprep.subr.mxu0 0.0
    %459 = vmatpush2.xpose.msra.mxu0 0.0
    %460 = vmatprep.mubr.f32.mxu0 0.0
    %461 = vmatmul.mubr.f32.gmra.mxu0 %v375
    %v462 = vpop.f32.mrf.mxu0
    %v463 = vadd.f32 0.0, %v462
    %v464 = vpop.f32.mrf.mxu0
    %465 = vmatprep.mubr.f32.mxu0 0.0
    %466 = vmatmul.mubr.f32.gmra.mxu0 %v378
    %v467 = vpop.f32.mrf.mxu0
    %v468 = vadd.f32 0.0, %v467
    %v469 = vpop.f32.mrf.mxu0
    %470 = vdwg.mxu0
    %vm471 = vcmask 523264
    %v472 = vsel %vm471, %v463, -inf
    %473 = vmax.xlane.f32.xlu0 %v472
    %v474 = vpop.xlane.xlu0 %473
    %v475 = vsel %vm471, %v468, -inf
    %476 = vmax.xlane.f32.xlu0 %v475
    %v477 = vpop.xlane.xlu0 %476
    %v478 = vsub.f32 %v463, %v474
    %v479 = vsub.f32 %v468, %v477
    %v480 = vmul.f32 %v478, 1.442695
    %v481 = vpow.pop %v480
    %v482 = vmul.f32 %v479, 1.442695
    %v483 = vpow.pop %v482
    %v484 = vmul.f32 %v481, %v276
    %v485 = vmul.f32 %v483, %v277
    %494 = vrot.lane.b32.xlu0 %v342, 64
    %v495 = vpop.permute.xlu0 %494
    %496 = vrot.lane.b32.xlu0 %v343, 64
    %v497 = vpop.permute.xlu0 %496
    %498 = vrot.lane.b32.xlu0 %v344, 64
    %v499 = vpop.permute.xlu0 %498
    %500 = vrot.lane.b32.xlu0 %v345, 64
    %v501 = vpop.permute.xlu0 %500
    %502 = vrot.lane.b32.xlu0 %v346, 64
    %v503 = vpop.permute.xlu0 %502
    %504 = vrot.lane.b32.xlu0 %v347, 64
    %v505 = vpop.permute.xlu0 %504
    %506 = vrot.lane.b32.xlu0 %v348, 64
    %v507 = vpop.permute.xlu0 %506
    %508 = vrot.lane.b32.xlu0 %v349, 64
    %v509 = vpop.permute.xlu0 %508
    %v519 = vsel %vm471, %v484, 0
    %v522 = vsel %vm471, %v485, 0
    %524 = vmatprep.subr.mxu0 0.0
    %525 = vmatpush1.msra.mxu0 0.0
    %526 = vmatprep.subr.mxu0 0.0
    %527 = vmatpush1.msra.mxu0 0.0
    %528 = vmatprep.subr.mxu0 0.0
    %529 = vmatpush1.msra.mxu0 0.0
    %530 = vmatprep.subr.mxu0 0.0
    %531 = vmatpush1.msra.mxu0 0.0
    %532 = vmatprep.subr.mxu0 0.0
    %533 = vmatpush1.msra.mxu0 0.0
    %534 = vmatprep.subr.mxu0 0.0
    %535 = vmatpush1.msra.mxu0 0.0
    %536 = vmatprep.subr.mxu0 0.0
    %537 = vmatpush1.msra.mxu0 0.0
    %538 = vmatprep.subr.mxu0 0.0
    %539 = vmatpush1.msra.mxu0 0.0
    %540 = vmatprep.subr.mxu0 0.0
    %541 = vmatpush1.msra.mxu0 %v509
    %542 = vmatprep.subr.mxu0 0.0
    %543 = vmatpush1.msra.mxu0 %v507
    %544 = vmatprep.subr.mxu0 0.0
    %545 = vmatpush1.msra.mxu0 %v505
    %546 = vmatprep.subr.mxu0 0.0
    %547 = vmatpush1.msra.mxu0 %v503
    %548 = vmatprep.subr.mxu0 0.0
    %549 = vmatpush1.msra.mxu0 %v501
    %550 = vmatprep.subr.mxu0 0.0
    %551 = vmatpush1.msra.mxu0 %v499
    %552 = vmatprep.subr.mxu0 0.0
    %553 = vmatpush1.msra.mxu0 %v497
    %554 = vmatprep.subr.mxu0 0.0
    %555 = vmatpush1.msra.mxu0 %v495
    %556 = vmatprep.subr.mxu0 0.0
    %557 = vmatpush2.msra.mxu0 0.0
    %558 = vmatprep.subr.mxu0 0.0
    %559 = vmatpush2.msra.mxu0 0.0
    %560 = vmatprep.subr.mxu0 0.0
    %561 = vmatpush2.msra.mxu0 0.0
    %562 = vmatprep.subr.mxu0 0.0
    %563 = vmatpush2.msra.mxu0 0.0
    %564 = vmatprep.subr.mxu0 0.0
    %565 = vmatpush2.msra.mxu0 0.0
    %566 = vmatprep.subr.mxu0 0.0
    %567 = vmatpush2.msra.mxu0 0.0
    %568 = vmatprep.subr.mxu0 0.0
    %569 = vmatpush2.msra.mxu0 0.0
    %570 = vmatprep.subr.mxu0 0.0
    %571 = vmatpush2.msra.mxu0 0.0
    %572 = vmatprep.subr.mxu0 0.0
    %573 = vmatpush2.msra.mxu0 0.0
    %574 = vmatprep.subr.mxu0 0.0
    %575 = vmatpush2.msra.mxu0 0.0
    %576 = vmatprep.subr.mxu0 0.0
    %577 = vmatpush2.msra.mxu0 0.0
    %578 = vmatprep.subr.mxu0 0.0
    %579 = vmatpush2.msra.mxu0 0.0
    %580 = vmatprep.subr.mxu0 0.0
    %581 = vmatpush2.msra.mxu0 0.0
    %582 = vmatprep.subr.mxu0 0.0
    %583 = vmatpush2.msra.mxu0 0.0
    %584 = vmatprep.subr.mxu0 0.0
    %585 = vmatpush2.msra.mxu0 0.0
    %586 = vmatprep.subr.mxu0 0.0
    %587 = vmatpush2.msra.mxu0 0.0
    %588 = vmatprep.mubr.f32.mxu0 0.0
    %589 = vmatmul.mubr.f32.gmra.mxu0 %v519
    %v590 = vpop.f32.mrf.mxu0
    %v591 = vadd.f32 0.0, %v590
    %v592 = vpop.f32.mrf.mxu0
    %593 = vmatprep.mubr.f32.mxu0 0.0
    %594 = vmatmul.mubr.f32.gmra.mxu0 %v522
    %v595 = vpop.f32.mrf.mxu0
    %v596 = vadd.f32 0.0, %v595
    %v597 = vpop.f32.mrf.mxu0
    %598 = vdwg.mxu0
    %599 = vmatprep.subr.mxu0 0.0
    %600 = vmatpush1.msra.mxu0 0.0
    %601 = vmatprep.subr.mxu0 0.0
    %602 = vmatpush1.msra.mxu0 0.0
    %603 = vmatprep.subr.mxu0 0.0
    %604 = vmatpush1.msra.mxu0 0.0
    %605 = vmatprep.subr.mxu0 0.0
    %606 = vmatpush1.msra.mxu0 0.0
    %607 = vmatprep.subr.mxu0 0.0
    %608 = vmatpush1.msra.mxu0 0.0
    %609 = vmatprep.subr.mxu0 0.0
    %610 = vmatpush1.msra.mxu0 0.0
    %611 = vmatprep.subr.mxu0 0.0
    %612 = vmatpush1.msra.mxu0 0.0
    %613 = vmatprep.subr.mxu0 0.0
    %614 = vmatpush1.msra.mxu0 0.0
    %615 = vmatprep.subr.mxu0 0.0
    %616 = vmatpush1.msra.mxu0 %v275
    %617 = vmatprep.subr.mxu0 0.0
    %618 = vmatpush1.msra.mxu0 %v274
    %619 = vmatprep.subr.mxu0 0.0
    %620 = vmatpush1.msra.mxu0 %v273
    %621 = vmatprep.subr.mxu0 0.0
    %622 = vmatpush1.msra.mxu0 %v272
    %623 = vmatprep.subr.mxu0 0.0
    %624 = vmatpush1.msra.mxu0 %v271
    %625 = vmatprep.subr.mxu0 0.0
    %626 = vmatpush1.msra.mxu0 %v270
    %627 = vmatprep.subr.mxu0 0.0
    %628 = vmatpush1.msra.mxu0 %v269
    %629 = vmatprep.subr.mxu0 0.0
    %630 = vmatpush1.msra.mxu0 %v268
    %631 = vmatprep.subr.mxu0 0.0
    %632 = vmatpush2.msra.mxu0 0.0
    %633 = vmatprep.subr.mxu0 0.0
    %634 = vmatpush2.msra.mxu0 0.0
    %635 = vmatprep.subr.mxu0 0.0
    %636 = vmatpush2.msra.mxu0 0.0
    %637 = vmatprep.subr.mxu0 0.0
    %638 = vmatpush2.msra.mxu0 0.0
    %639 = vmatprep.subr.mxu0 0.0
    %640 = vmatpush2.msra.mxu0 0.0
    %641 = vmatprep.subr.mxu0 0.0
    %642 = vmatpush2.msra.mxu0 0.0
    %643 = vmatprep.subr.mxu0 0.0
    %644 = vmatpush2.msra.mxu0 0.0
    %645 = vmatprep.subr.mxu0 0.0
    %646 = vmatpush2.msra.mxu0 0.0
    %647 = vmatprep.subr.mxu0 0.0
    %648 = vmatpush2.msra.mxu0 0.0
    %649 = vmatprep.subr.mxu0 0.0
    %650 = vmatpush2.msra.mxu0 0.0
    %651 = vmatprep.subr.mxu0 0.0
    %652 = vmatpush2.msra.mxu0 0.0
    %653 = vmatprep.subr.mxu0 0.0
    %654 = vmatpush2.msra.mxu0 0.0
    %655 = vmatprep.subr.mxu0 0.0
    %656 = vmatpush2.msra.mxu0 0.0
    %657 = vmatprep.subr.mxu0 0.0
    %658 = vmatpush2.msra.mxu0 0.0
    %659 = vmatprep.subr.mxu0 0.0
    %660 = vmatpush2.msra.mxu0 0.0
    %661 = vmatprep.subr.mxu0 0.0
    %662 = vmatpush2.msra.mxu0 0.0
    %663 = vmatprep.mubr.f32.mxu0 0.0
    %664 = vmatmul.mubr.f32.gmra.mxu0 %v519
    %v665 = vpop.f32.mrf.mxu0
    %v666 = vadd.f32 0.0, %v665
    %v667 = vpop.f32.mrf.mxu0
    %668 = vmatprep.mubr.f32.mxu0 0.0
    %669 = vmatmul.mubr.f32.gmra.mxu0 %v522
    %v670 = vpop.f32.mrf.mxu0
    %v671 = vadd.f32 0.0, %v670
    %v672 = vpop.f32.mrf.mxu0
    %673 = vdwg.mxu0
    %v674 = vrcp.pop %v666
    %v675 = vmul.f32 %v591, %v674
    %v676 = vrcp.pop %v671
    %v677 = vmul.f32 %v596, %v676
    %v678 = vld [vmem:[#allocation7 + $0x20] sm:$0xff]
    %v679 = vld [vmem:[#allocation7 + $0x28] sm:$0xff]
    %v680 = vld [vmem:[#allocation7 + $0x30] sm:$0xff]
    %v681 = vld [vmem:[#allocation7 + $0x38] sm:$0xff]
    %v683 = vsel %vm60, %v675, 0
    %v686 = vsel %vm60, %v677, 0
    %688 = vmatprep.subr.mxu0 0.0
    %689 = vmatpush1.msra.mxu0 0.0
    %690 = vmatprep.subr.mxu0 0.0
    %691 = vmatpush1.msra.mxu0 0.0
    %692 = vmatprep.subr.mxu0 0.0
    %693 = vmatpush1.msra.mxu0 0.0
    %694 = vmatprep.subr.mxu0 0.0
    %695 = vmatpush1.msra.mxu0 0.0
    %696 = vmatprep.subr.mxu0 0.0
    %697 = vmatpush1.msra.mxu0 0.0
    %698 = vmatprep.subr.mxu0 0.0
    %699 = vmatpush1.msra.mxu0 0.0
    %700 = vmatprep.subr.mxu0 0.0
    %701 = vmatpush1.msra.mxu0 0.0
    %702 = vmatprep.subr.mxu0 0.0
    %703 = vmatpush1.msra.mxu0 0.0
    %704 = vmatprep.subr.mxu0 0.0
    %705 = vmatpush1.msra.mxu0 0.0
    %706 = vmatprep.subr.mxu0 0.0
    %707 = vmatpush1.msra.mxu0 0.0
    %708 = vmatprep.subr.mxu0 0.0
    %709 = vmatpush1.msra.mxu0 0.0
    %710 = vmatprep.subr.mxu0 0.0
    %711 = vmatpush1.msra.mxu0 0.0
    %712 = vmatprep.subr.mxu0 0.0
    %713 = vmatpush1.msra.mxu0 %v681
    %714 = vmatprep.subr.mxu0 0.0
    %715 = vmatpush1.msra.mxu0 %v680
    %716 = vmatprep.subr.mxu0 0.0
    %717 = vmatpush1.msra.mxu0 %v679
    %718 = vmatprep.subr.mxu0 0.0
    %719 = vmatpush1.msra.mxu0 %v678
    %720 = vmatprep.subr.mxu0 0.0
    %721 = vmatpush2.msra.mxu0 0.0
    %722 = vmatprep.subr.mxu0 0.0
    %723 = vmatpush2.msra.mxu0 0.0
    %724 = vmatprep.subr.mxu0 0.0
    %725 = vmatpush2.msra.mxu0 0.0
    %726 = vmatprep.subr.mxu0 0.0
    %727 = vmatpush2.msra.mxu0 0.0
    %728 = vmatprep.subr.mxu0 0.0
    %729 = vmatpush2.msra.mxu0 0.0
    %730 = vmatprep.subr.mxu0 0.0
    %731 = vmatpush2.msra.mxu0 0.0
    %732 = vmatprep.subr.mxu0 0.0
    %733 = vmatpush2.msra.mxu0 0.0
    %734 = vmatprep.subr.mxu0 0.0
    %735 = vmatpush2.msra.mxu0 0.0
    %736 = vmatprep.subr.mxu0 0.0
    %737 = vmatpush2.msra.mxu0 0.0
    %738 = vmatprep.subr.mxu0 0.0
    %739 = vmatpush2.msra.mxu0 0.0
    %740 = vmatprep.subr.mxu0 0.0
    %741 = vmatpush2.msra.mxu0 0.0
    %742 = vmatprep.subr.mxu0 0.0
    %743 = vmatpush2.msra.mxu0 0.0
    %744 = vmatprep.subr.mxu0 0.0
    %745 = vmatpush2.msra.mxu0 0.0
    %746 = vmatprep.subr.mxu0 0.0
    %747 = vmatpush2.msra.mxu0 0.0
    %748 = vmatprep.subr.mxu0 0.0
    %749 = vmatpush2.msra.mxu0 0.0
    %750 = vmatprep.subr.mxu0 0.0
    %751 = vmatpush2.msra.mxu0 0.0
    %752 = vmatprep.mubr.f32.mxu0 0.0
    %753 = vmatmul.mubr.f32.gmra.mxu0 %v683
    %v754 = vpop.f32.mrf.mxu0
    %v755 = vadd.f32 0.0, %v754
    %v756 = vpop.f32.mrf.mxu0
    %757 = vmatprep.mubr.f32.mxu0 0.0
    %758 = vmatmul.mubr.f32.gmra.mxu0 %v686
    %v759 = vpop.f32.mrf.mxu0
    %v760 = vadd.f32 0.0, %v759
    %v761 = vpop.f32.mrf.mxu0
    %762 = vdwg.mxu0
    %v763 = vsel %vm60, %v755, 0.0
    %764 = vadd.xlane.f32.xlu0 %v763
    %v765 = vpop.xlane.xlu0 %764
    %v766 = vsel %vm60, %v760, 0.0
    %767 = vadd.xlane.f32.xlu0 %v766
    %v768 = vpop.xlane.xlu0 %767
    %v769 = vmul.f32 %v765, %v73
    %v770 = vmul.f32 %v768, %v73
    %v771 = vsub.f32 %v755, %v769
    %v772 = vsub.f32 %v760, %v770
    %v773 = vmul.f32 %v771, %v771
    %v774 = vmul.f32 %v772, %v772
    %v775 = vsel %vm60, %v773, 0.0
    %776 = vadd.xlane.f32.xlu0 %v775
    %v777 = vpop.xlane.xlu0 %776
    %v778 = vsel %vm60, %v774, 0.0
    %779 = vadd.xlane.f32.xlu0 %v778
    %v780 = vpop.xlane.xlu0 %779
    %v781 = vmul.f32 %v777, %v73
    %v782 = vmul.f32 %v780, %v73
    %v783 = vadd.f32 %v781, 1e-05
    %v784 = vadd.f32 %v782, 1e-05
    %v785 = vrsqrt.pop %v783
    %v786 = vrsqrt.pop %v784
    %v787 = vmul.f32 %v771, %v785
    %v788 = vmul.f32 %v772, %v786
    %v789 = vld [vmem:[#allocation7 + $0xf1] sm:$0x1]
    %v790 = vlaneseq
    %v791 = vshrl.u32 %v790, 7
    %v792 = vsub.s32 0, %v791
    %v793 = vrot.slane %v789, %v792
    %v794 = vmul.f32 %v787, %v793
    %v795 = vmul.f32 %v788, %v793
    %v796 = vld [vmem:[#allocation7 + $0xf2] sm:$0x1]
    %v797 = vlaneseq
    %v798 = vshrl.u32 %v797, 7
    %v799 = vsub.s32 0, %v798
    %v800 = vrot.slane %v796, %v799
    %v801 = vadd.f32 %v794, %v800
    %v802 = vadd.f32 %v795, %v800
    %803 = vst.msk [vmem:[#allocation8] sm:$0xff] %vm60, %v801
    %804 = vst.msk [vmem:[#allocation8 + $0x8] sm:$0xff] %vm60, %v802
    // Predicated region
    $region26: #{attention_layer_forward.1} parent=1 // pred_check
      _
    $region27: #{attention_layer_forward.1} parent=1 // pred_check_branch
      %806 = sbr.rel (0) target = $region29
    $region28: #{attention_layer_forward.1} parent=1 // pred_region
      %s808 = ssub.s32 256, 256
      %809 = vsyncadd [#allocation4], %s808
      %s810 = sshll.u32 [#allocation8], 4
      %s811 = int_to_ptr.vmem [resolvable:$true] %s810
      %816 = dma.vmem_to_hbm [thread:$0]  %s811, 256, %s3, [#allocation4], 128, 128, 8
    $region29: #{attention_layer_forward.1} parent=1 // pred_fallthru
      _
    // Predicated region
    $region30: #{attention_layer_forward.1} parent=1 // pred_check
      _
    $region31: #{attention_layer_forward.1} parent=1 // pred_check_branch
      %818 = sbr.rel (0) target = $region33
    $region32: #{attention_layer_forward.1} parent=1 // pred_region
      %819 = dma.done [#allocation4], 256
    $region33: #{attention_layer_forward.1} parent=1 // pred_fallthru
      _
    %820 = vsyncpa [#allocation3], 1
    %821 = vsyncpa [#allocation6], 1
    %822 = vsyncpa [#allocation4], 1

</llo_original>
